<compile_context>
chip_gen: v5e
topology: v5e:2x2
jax: 0.10.0
libtpu: 0.0.40
codegen_flags: <defaults>
</compile_context>

<pallas_src>
import functools

import jax
import jax.numpy as jnp
from jax.experimental import pallas as pl
from jax.experimental.pallas import tpu as pltpu


def _round_up(x, m):
    return ((x + m - 1) // m) * m


def _pad2d(a, rows, cols):
    r, c = a.shape
    if r == rows and c == cols:
        return a
    return jnp.pad(a, ((0, rows - r), (0, cols - c)))


def _pick_tile(dim_p, cap, unit):
    """Largest divisor of dim_p that is a multiple of `unit` and <= cap."""
    best = unit
    t = unit
    limit = min(dim_p, max(cap, unit))
    while t <= limit:
        if dim_p % t == 0:
            best = t
        t += unit
    return best


def _device_kind():
    try:
        return jax.devices()[0].device_kind.lower()
    except Exception:
        return ""


def _is_v7x():
    k = _device_kind()
    return ("v7" in k) or ("7x" in k)


def _vmem_budget():
    """(usable-budget for resident weights, explicit scoped-vmem limit)."""
    if _is_v7x():                                  # 64 MiB physical VMEM
        return 40 * 1024 * 1024, 48 * 1024 * 1024
    return 96 * 1024 * 1024, 100 * 1024 * 1024    # v5e/v6e: 128 MiB physical


# ---------------------------------------------------------------------------
# Fused MLP kernel: out = relu(x @ w1 + b1) @ w2 + b2, weights resident in VMEM
# ---------------------------------------------------------------------------
def _fused_mlp_kernel(x_ref, w1_ref, b1_ref, w2_ref, b2_ref, o_ref):
    x = x_ref[...]
    if x.dtype != w1_ref.dtype:
        x = x.astype(w1_ref.dtype)
    h = jnp.dot(x, w1_ref[...], preferred_element_type=jnp.float32)
    h = jnp.maximum(h + b1_ref[...].astype(jnp.float32), 0.0)   # f32 epilogue
    out = jnp.dot(h.astype(w2_ref.dtype), w2_ref[...],
                  preferred_element_type=jnp.float32)
    out = out + b2_ref[...].astype(jnp.float32)
    o_ref[...] = out.astype(o_ref.dtype)


def fused_mlp(x2d, pp, *, out_dtype):
    """Single-launch MLP; returns the (B_p, Fout_p) padded output."""
    B = x2d.shape[0]
    Fin_p, H_p, Fout_p = pp["pdims"]
    w1p, b1p, w2p, b2p = pp["w1"], pp["b1"], pp["w2"], pp["b2"]

    B_p = _round_up(B, 8)                    # pad batch to sublanes only
    cap = 128 if H_p >= 512 else 256         # keep tm*H_p epilogue in vregs
    tm = _pick_tile(B_p, cap, 8)
    if B_p >= 16 and B_p // tm < 2:          # >=2 blocks -> both v7x TCs busy
        tm = _pick_tile(B_p, max(8, tm // 2), 8)

    xp = _pad2d(x2d, B_p, Fin_p)
    _, vmem_limit = _vmem_budget()

    def call(single_buffer_weights):
        def const_spec(shape):
            # Constant index map -> the block is resident, not pipelined;
            # request a single buffer so it does not cost 2x VMEM.
            if single_buffer_weights:
                return pl.BlockSpec(shape, lambda i: (0, 0),
                                    pipeline_mode=pl.Buffered(1))
            return pl.BlockSpec(shape, lambda i: (0, 0))

        return pl.pallas_call(
            _fused_mlp_kernel,
            out_shape=jax.ShapeDtypeStruct((B_p, Fout_p), out_dtype),
            grid=(B_p // tm,),
            in_specs=[
                pl.BlockSpec((tm, Fin_p), lambda i: (i, 0)),
                const_spec((Fin_p, H_p)),
                const_spec((1, H_p)),
                const_spec((H_p, Fout_p)),
                const_spec((1, Fout_p)),
            ],
            out_specs=pl.BlockSpec((tm, Fout_p), lambda i: (i, 0)),
            compiler_params=pltpu.CompilerParams(
                dimension_semantics=("parallel",),
                vmem_limit_bytes=vmem_limit),
        )(xp, w1p, b1p, w2p, b2p)

    try:
        return call(True)
    except Exception:        # fall back if Buffered(1) is unsupported
        return call(False)


# ---------------------------------------------------------------------------
# General M/N/K-tiled linear (fallback for layers too big to keep resident)
# ---------------------------------------------------------------------------
def _tiled_linear_kernel(x_ref, w_ref, b_ref, o_ref, acc_ref, *, apply_relu):
    k = pl.program_id(2)

    @pl.when(k == 0)
    def _():
        acc_ref[...] = jnp.zeros_like(acc_ref)

    x = x_ref[...]
    if x.dtype != w_ref.dtype:
        x = x.astype(w_ref.dtype)
    acc_ref[...] += jnp.dot(x, w_ref[...], preferred_element_type=jnp.float32)

    @pl.when(k == pl.num_programs(2) - 1)
    def _():
        out = acc_ref[...] + b_ref[...].astype(jnp.float32)
        if apply_relu:
            out = jnp.maximum(out, 0.0)
        o_ref[...] = out.astype(o_ref.dtype)


def pallas_linear_tiled(x, w_p, b_p, *, apply_relu, out_dtype=None):
    """y = x @ w_p + b_p (optional ReLU). w_p/b_p are pre-padded to (·,128).

    x is padded only to (8,128) alignment (no tile-multiple padding).
    Returns the PADDED (M_p, N_p) result; the caller trims / chains it.
    """
    M, K = x.shape
    K_p, N_p = w_p.shape
    assert _round_up(K, 128) == K_p
    M_p = _round_up(M, 8)
    out_dtype = out_dtype if out_dtype is not None else x.dtype

    # Generation-aware tile caps; tiles divide the (8,128)-rounded dims exactly.
    if _is_v7x():
        tm_cap, tn_cap, tk_cap = 512, 512, 512      # keep headroom in 64 MiB
    else:
        tm_cap, tn_cap, tk_cap = 512, 512, 1024     # v5e/v6e: 128 MiB VMEM
    tm = _pick_tile(M_p, tm_cap, 8)
    tn = _pick_tile(N_p, tn_cap, 128)
    tk = _pick_tile(K_p, tk_cap, 128)

    xp = _pad2d(x, M_p, K_p)
    _, vmem_limit = _vmem_budget()

    kernel = functools.partial(_tiled_linear_kernel, apply_relu=apply_relu)
    return pl.pallas_call(
        kernel,
        out_shape=jax.ShapeDtypeStruct((M_p, N_p), out_dtype),
        grid=(M_p // tm, N_p // tn, K_p // tk),
        in_specs=[
            pl.BlockSpec((tm, tk), lambda i, j, k: (i, k)),
            pl.BlockSpec((tk, tn), lambda i, j, k: (k, j)),
            pl.BlockSpec((1, tn), lambda i, j, k: (0, j)),
        ],
        out_specs=pl.BlockSpec((tm, tn), lambda i, j, k: (i, j)),
        scratch_shapes=[pltpu.VMEM((tm, tn), jnp.float32)],
        compiler_params=pltpu.CompilerParams(
            dimension_semantics=("parallel", "parallel", "arbitrary"),
            vmem_limit_bytes=vmem_limit),
    )(xp, w_p, b_p)


# ---------------------------------------------------------------------------
# Parameter prep (one-time padding) and module-level forward
# ---------------------------------------------------------------------------
def prepare_params(params, *, weight_dtype=None):
    """Pad weights/biases to (·,128)-aligned shapes ONCE, not per forward.

    Weights are stored (in, out) == transpose of torch nn.Linear.weight.
    Biases stay f32; weights may optionally be cast to bf16 (f32 accumulation
    and f32 bias/ReLU epilogue happen inside the kernels).
    """
    (w1, b1), (w2, b2) = params
    Fin, H = w1.shape
    Fout = w2.shape[1]
    Fin_p, H_p, Fout_p = (_round_up(d, 128) for d in (Fin, H, Fout))
    if weight_dtype is not None:
        w1 = w1.astype(weight_dtype)
        w2 = w2.astype(weight_dtype)
    return {
        "w1": _pad2d(w1, Fin_p, H_p),
        "b1": _pad2d(b1.astype(jnp.float32), 1, H_p),
        "w2": _pad2d(w2, H_p, Fout_p),
        "b2": _pad2d(b2.astype(jnp.float32), 1, Fout_p),
        "dims": (Fin, H, Fout),
        "pdims": (Fin_p, H_p, Fout_p),
    }


def mlp_forward(x, pp):
    """x.view(B, -1) -> fc1 -> ReLU -> fc2   (matches NNModel.forward)."""
    B = x.shape[0]
    h = x.reshape(B, -1)                       # x.view(x.size(0), -1)
    Fin, H, Fout = pp["dims"]
    Fin_p, H_p, Fout_p = pp["pdims"]
    assert h.shape[1] == Fin
    out_dtype = x.dtype

    # VMEM estimate for the fused path: resident weights (single-buffered) +
    # f32 hidden scratch + double-buffered x/out tiles.
    B_p = _round_up(B, 8)
    cap = 128 if H_p >= 512 else 256
    tm = _pick_tile(B_p, cap, 8)
    wbytes = pp["w1"].dtype.itemsize * (Fin_p * H_p + H_p * Fout_p) \
        + 4 * (H_p + Fout_p)
    act_bytes = 4 * tm * H_p
    io_bytes = 2 * tm * (Fin_p * h.dtype.itemsize + Fout_p * 4)
    budget, _ = _vmem_budget()

    if wbytes + act_bytes + io_bytes <= budget:
        out_p = fused_mlp(h, pp, out_dtype=out_dtype)
    else:
        # Tiled fallback: hidden activation stays padded (and in the weight
        # dtype) between the two calls — zero-padded columns are inert.
        hid = pallas_linear_tiled(h, pp["w1"], pp["b1"], apply_relu=True,
                                  out_dtype=pp["w1"].dtype)
        out_p = pallas_linear_tiled(hid, pp["w2"], pp["b2"], apply_relu=False,
                                    out_dtype=out_dtype)
    return out_p[:B, :Fout]


def init_mlp_params(key, input_size, hidden_size, output_size,
                    dtype=jnp.float32):
    """Init matching NNModel(fc1, fc2) shapes (nn.Linear default scale)."""
    sizes = [input_size, hidden_size, output_size]
    params = []
    for fin, fout in zip(sizes[:-1], sizes[1:]):
        key, wk, bk = jax.random.split(key, 3)
        bound = 1.0 / (fin ** 0.5)
        w = jax.random.uniform(wk, (fin, fout), dtype, minval=-bound, maxval=bound)
        b = jax.random.uniform(bk, (1, fout), dtype, minval=-bound, maxval=bound)
        params.append((w, b))
    return params


if __name__ == "__main__":
    key = jax.random.PRNGKey(0)
    key, xk = jax.random.split(key)

    # Small shapes consistent with the module: batch=2, flattened input 4*16=64.
    batch, input_size, hidden_size, output_size = 2, 64, 32, 8
    x = jax.random.normal(xk, (batch, 4, 16), dtype=jnp.float32)

    params = init_mlp_params(key, input_size, hidden_size, output_size)
    (w1, b1), (w2, b2) = params
    ref = x.reshape(batch, -1)
    ref = jnp.maximum(ref @ w1 + b1, 0.0) @ w2 + b2

    # f32 weights — fused single-launch path.
    pp = prepare_params(params)
    out = jax.block_until_ready(mlp_forward(x, pp))
    assert out.shape == (batch, output_size)
    assert jnp.allclose(out, ref, atol=1e-4, rtol=1e-4)

    # bf16 weights with f32 accumulation — looser tolerance.
    pp_bf16 = prepare_params(params, weight_dtype=jnp.bfloat16)
    out_bf16 = jax.block_until_ready(mlp_forward(x, pp_bf16))
    assert jnp.allclose(out_bf16, ref, atol=5e-2, rtol=5e-2)

    # Exercise the tiled fallback directly (non-multiple M, K=640, N=384):
    # tiles now divide the (8,128)-rounded dims exactly (tk=640, tn=384).
    key, ak, bk_, ck = jax.random.split(key, 4)
    M2, K2, N2 = 50, 640, 384
    xt = jax.random.normal(ak, (M2, K2), dtype=jnp.float32)
    wt = jax.random.normal(bk_, (K2, N2), dtype=jnp.float32) / (K2 ** 0.5)
    bt = jax.random.normal(ck, (1, N2), dtype=jnp.float32)
    wt_p = _pad2d(wt, _round_up(K2, 128), _round_up(N2, 128))
    bt_p = _pad2d(bt, 1, _round_up(N2, 128))
    yt = jax.block_until_ready(
        pallas_linear_tiled(xt, wt_p, bt_p, apply_relu=True))[:M2, :N2]
    yref = jnp.maximum(xt @ wt + bt, 0.0)
    assert jnp.allclose(yt, yref, atol=2e-3, rtol=2e-3)

    print("KERNEL_OK")
</pallas_src>

<mosaic_0001>
module attributes {stable_mosaic.version = 11 : i64} {
  func.func @_fused_mlp_kernel(%arg0: i32, %arg1: memref<8x128xf32, #tpu.memory_space<vmem>>, %arg2: memref<128x128xf32, #tpu.memory_space<vmem>>, %arg3: memref<1x128xf32, #tpu.memory_space<vmem>>, %arg4: memref<128x128xf32, #tpu.memory_space<vmem>>, %arg5: memref<1x128xf32, #tpu.memory_space<vmem>>, %arg6: memref<8x128xf32, #tpu.memory_space<vmem>>) attributes {dimension_semantics = [#tpu.dimension_semantics<parallel>], iteration_bounds = array<i64: 1>, scalar_prefetch = 0 : i64, scratch_operands = 0 : i64, tpu.core_type = #tpu.core_type<tc>, window_params = [{transform_indices = @transform_0, window_bounds = array<i64: 8, 128>}, {pipeline_mode = #tpu.pipeline_mode<synchronous>, transform_indices = @transform_1, window_bounds = array<i64: 128, 128>}, {pipeline_mode = #tpu.pipeline_mode<synchronous>, transform_indices = @transform_2, window_bounds = array<i64: 1, 128>}, {pipeline_mode = #tpu.pipeline_mode<synchronous>, transform_indices = @transform_3, window_bounds = array<i64: 128, 128>}, {pipeline_mode = #tpu.pipeline_mode<synchronous>, transform_indices = @transform_4, window_bounds = array<i64: 1, 128>}, {transform_indices = @transform_5, window_bounds = array<i64: 8, 128>}]} {
    %c0 = arith.constant 0 : index
    %c0_0 = arith.constant 0 : index
    %0 = vector.load %arg1[%c0, %c0_0] : memref<8x128xf32, #tpu.memory_space<vmem>>, vector<8x128xf32>
    %c0_1 = arith.constant 0 : index
    %c0_2 = arith.constant 0 : index
    %1 = vector.load %arg2[%c0_1, %c0_2] : memref<128x128xf32, #tpu.memory_space<vmem>>, vector<128x128xf32>
    %cst = arith.constant dense<0.000000e+00> : vector<8x128xf32>
    %2 = tpu.matmul %0, %1, %cst {dimension_numbers = #tpu.dot_dimension_numbers<[1], [0], [0], [1], [0, 0, 1, 1], [], []>} : vector<8x128xf32>, vector<128x128xf32>, vector<8x128xf32> -> vector<8x128xf32>
    %c0_3 = arith.constant 0 : index
    %c0_4 = arith.constant 0 : index
    %3 = vector.load %arg3[%c0_3, %c0_4] : memref<1x128xf32, #tpu.memory_space<vmem>>, vector<1x128xf32>
    %4 = vector.broadcast %3 : vector<1x128xf32> to vector<8x128xf32>
    %5 = arith.addf %2, %4 : vector<8x128xf32>
    %cst_5 = arith.constant 0.000000e+00 : f32
    %6 = vector.broadcast %cst_5 : f32 to vector<8x128xf32>
    %7 = arith.maximumf %5, %6 : vector<8x128xf32>
    %c0_6 = arith.constant 0 : index
    %c0_7 = arith.constant 0 : index
    %8 = vector.load %arg4[%c0_6, %c0_7] : memref<128x128xf32, #tpu.memory_space<vmem>>, vector<128x128xf32>
    %cst_8 = arith.constant dense<0.000000e+00> : vector<8x128xf32>
    %9 = tpu.matmul %7, %8, %cst_8 {dimension_numbers = #tpu.dot_dimension_numbers<[1], [0], [0], [1], [0, 0, 1, 1], [], []>} : vector<8x128xf32>, vector<128x128xf32>, vector<8x128xf32> -> vector<8x128xf32>
    %c0_9 = arith.constant 0 : index
    %c0_10 = arith.constant 0 : index
    %10 = vector.load %arg5[%c0_9, %c0_10] : memref<1x128xf32, #tpu.memory_space<vmem>>, vector<1x128xf32>
    %11 = vector.broadcast %10 : vector<1x128xf32> to vector<8x128xf32>
    %12 = arith.addf %9, %11 : vector<8x128xf32>
    %c0_11 = arith.constant 0 : index
    %c0_12 = arith.constant 0 : index
    %13 = vector.load %arg6[%c0_11, %c0_12] : memref<8x128xf32, #tpu.memory_space<vmem>>, vector<8x128xf32>
    tpu.vector_store %arg6[%c0_11, %c0_12], %12 {strides = array<i32>} : memref<8x128xf32, #tpu.memory_space<vmem>>, vector<8x128xf32>,
    return
  }
  func.func @transform_0(%arg0: i32) -> (i32, i32) {
    %c0_i32 = arith.constant 0 : i32
    %c0_i32_0 = arith.constant 0 : i32
    return %arg0, %c0_i32 : i32, i32
  }
  func.func @transform_1(%arg0: i32) -> (i32, i32) {
    %c0_i32 = arith.constant 0 : i32
    %c0_i32_0 = arith.constant 0 : i32
    %c0_i32_1 = arith.constant 0 : i32
    return %c0_i32, %c0_i32_0 : i32, i32
  }
  func.func @transform_2(%arg0: i32) -> (i32, i32) {
    %c0_i32 = arith.constant 0 : i32
    %c0_i32_0 = arith.constant 0 : i32
    %c0_i32_1 = arith.constant 0 : i32
    return %c0_i32, %c0_i32_0 : i32, i32
  }
  func.func @transform_3(%arg0: i32) -> (i32, i32) {
    %c0_i32 = arith.constant 0 : i32
    %c0_i32_0 = arith.constant 0 : i32
    %c0_i32_1 = arith.constant 0 : i32
    return %c0_i32, %c0_i32_0 : i32, i32
  }
  func.func @transform_4(%arg0: i32) -> (i32, i32) {
    %c0_i32 = arith.constant 0 : i32
    %c0_i32_0 = arith.constant 0 : i32
    %c0_i32_1 = arith.constant 0 : i32
    return %c0_i32, %c0_i32_0 : i32, i32
  }
  func.func @transform_5(%arg0: i32) -> (i32, i32) {
    %c0_i32 = arith.constant 0 : i32
    %c0_i32_0 = arith.constant 0 : i32
    return %arg0, %c0_i32 : i32, i32
  }
}

module attributes {stable_mosaic.version = 11 : i64} {
  func.func @_fused_mlp_kernel(%arg0: i32, %arg1: memref<8x128xf32, #tpu.memory_space<vmem>>, %arg2: memref<128x128xf32, #tpu.memory_space<vmem>>, %arg3: memref<1x128xf32, #tpu.memory_space<vmem>>, %arg4: memref<128x128xf32, #tpu.memory_space<vmem>>, %arg5: memref<1x128xf32, #tpu.memory_space<vmem>>, %arg6: memref<8x128xf32, #tpu.memory_space<vmem>>) attributes {dimension_semantics = [#tpu.dimension_semantics<parallel>], iteration_bounds = array<i64: 1>, scalar_prefetch = 0 : i64, scratch_operands = 0 : i64, tpu.core_type = #tpu.core_type<tc>, window_params = [{transform_indices = @transform_0, window_bounds = array<i64: 8, 128>}, {pipeline_mode = #tpu.pipeline_mode<synchronous>, transform_indices = @transform_1, window_bounds = array<i64: 128, 128>}, {pipeline_mode = #tpu.pipeline_mode<synchronous>, transform_indices = @transform_2, window_bounds = array<i64: 1, 128>}, {pipeline_mode = #tpu.pipeline_mode<synchronous>, transform_indices = @transform_3, window_bounds = array<i64: 128, 128>}, {pipeline_mode = #tpu.pipeline_mode<synchronous>, transform_indices = @transform_4, window_bounds = array<i64: 1, 128>}, {transform_indices = @transform_5, window_bounds = array<i64: 8, 128>}]} {
    %c0 = arith.constant 0 : index
    %c0_0 = arith.constant 0 : index
    %0 = vector.load %arg1[%c0, %c0_0] : memref<8x128xf32, #tpu.memory_space<vmem>>, vector<8x128xf32>
    %c0_1 = arith.constant 0 : index
    %c0_2 = arith.constant 0 : index
    %1 = vector.load %arg2[%c0_1, %c0_2] : memref<128x128xf32, #tpu.memory_space<vmem>>, vector<128x128xf32>
    %cst = arith.constant dense<0.000000e+00> : vector<8x128xf32>
    %2 = tpu.matmul %0, %1, %cst {dimension_numbers = #tpu.dot_dimension_numbers<[1], [0], [0], [1], [0, 0, 1, 1], [], []>} : vector<8x128xf32>, vector<128x128xf32>, vector<8x128xf32> -> vector<8x128xf32>
    %c0_3 = arith.constant 0 : index
    %c0_4 = arith.constant 0 : index
    %3 = vector.load %arg3[%c0_3, %c0_4] : memref<1x128xf32, #tpu.memory_space<vmem>>, vector<1x128xf32>
    %4 = vector.broadcast %3 : vector<1x128xf32> to vector<8x128xf32>
    %5 = arith.addf %2, %4 : vector<8x128xf32>
    %cst_5 = arith.constant 0.000000e+00 : f32
    %6 = vector.broadcast %cst_5 : f32 to vector<8x128xf32>
    %7 = arith.maximumf %5, %6 : vector<8x128xf32>
    %c0_6 = arith.constant 0 : index
    %c0_7 = arith.constant 0 : index
    %8 = vector.load %arg4[%c0_6, %c0_7] : memref<128x128xf32, #tpu.memory_space<vmem>>, vector<128x128xf32>
    %cst_8 = arith.constant dense<0.000000e+00> : vector<8x128xf32>
    %9 = tpu.matmul %7, %8, %cst_8 {dimension_numbers = #tpu.dot_dimension_numbers<[1], [0], [0], [1], [0, 0, 1, 1], [], []>} : vector<8x128xf32>, vector<128x128xf32>, vector<8x128xf32> -> vector<8x128xf32>
    %c0_9 = arith.constant 0 : index
    %c0_10 = arith.constant 0 : index
    %10 = vector.load %arg5[%c0_9, %c0_10] : memref<1x128xf32, #tpu.memory_space<vmem>>, vector<1x128xf32>
    %11 = vector.broadcast %10 : vector<1x128xf32> to vector<8x128xf32>
    %12 = arith.addf %9, %11 : vector<8x128xf32>
    %c0_11 = arith.constant 0 : index
    %c0_12 = arith.constant 0 : index
    %13 = vector.load %arg6[%c0_11, %c0_12] : memref<8x128xf32, #tpu.memory_space<vmem>>, vector<8x128xf32>
    tpu.vector_store %arg6[%c0_11, %c0_12], %12 {strides = array<i32>} : memref<8x128xf32, #tpu.memory_space<vmem>>, vector<8x128xf32>,
    return
  }
  func.func @transform_0(%arg0: i32) -> (i32, i32) {
    %c0_i32 = arith.constant 0 : i32
    %c0_i32_0 = arith.constant 0 : i32
    return %arg0, %c0_i32 : i32, i32
  }
  func.func @transform_1(%arg0: i32) -> (i32, i32) {
    %c0_i32 = arith.constant 0 : i32
    %c0_i32_0 = arith.constant 0 : i32
    %c0_i32_1 = arith.constant 0 : i32
    return %c0_i32, %c0_i32_0 : i32, i32
  }
  func.func @transform_2(%arg0: i32) -> (i32, i32) {
    %c0_i32 = arith.constant 0 : i32
    %c0_i32_0 = arith.constant 0 : i32
    %c0_i32_1 = arith.constant 0 : i32
    return %c0_i32, %c0_i32_0 : i32, i32
  }
  func.func @transform_3(%arg0: i32) -> (i32, i32) {
    %c0_i32 = arith.constant 0 : i32
    %c0_i32_0 = arith.constant 0 : i32
    %c0_i32_1 = arith.constant 0 : i32
    return %c0_i32, %c0_i32_0 : i32, i32
  }
  func.func @transform_4(%arg0: i32) -> (i32, i32) {
    %c0_i32 = arith.constant 0 : i32
    %c0_i32_0 = arith.constant 0 : i32
    %c0_i32_1 = arith.constant 0 : i32
    return %c0_i32, %c0_i32_0 : i32, i32
  }
  func.func @transform_5(%arg0: i32) -> (i32, i32) {
    %c0_i32 = arith.constant 0 : i32
    %c0_i32_0 = arith.constant 0 : i32
    return %arg0, %c0_i32 : i32, i32
  }
}

</mosaic_0001>

<llo_original>
// kernel: tpu_custom_call.1
$region0: #{tpu_custom_call.1}
  #allocation0 [shape = 'u32[]', space=smem, size = 0x4, offset = 0x4, fixed_abs, tag = 'smem constant byte address 0x4 - core index']
  #allocation1 [shape = 'u32[72,128]{1,0:T(1,128)}', space=vmem, size = 0x9000, scoped, tag = 'internal scratch']
  %s0 = inlined_call_operand.hbm [shape: f32[8,128], index: 0, kind: input, shape index: {}]
  %s1 = inlined_call_operand.hbm [shape: f32[128,128], index: 1, kind: input, shape index: {}]
  %s2 = inlined_call_operand.vmem [shape: f32[1,128], index: 2, kind: input, shape index: {}]
  %s3 = inlined_call_operand.hbm [shape: f32[128,128], index: 3, kind: input, shape index: {}]
  %s4 = inlined_call_operand.vmem [shape: f32[1,128], index: 4, kind: input, shape index: {}]
  %s5 = inlined_call_operand.hbm [shape: f32[8,128], index: 5, kind: output, shape index: {}]
  %s6 = sld [smem:[#allocation0]]
  $region42: #{tpu_custom_call.1} parent=0
    _
  %s8 = ssub.s32 1, %s6
  %s9 = scalar_select 0, %s8, %s6
  $region1: #{tpu_custom_call.1} parent=0
    #allocation2 [shape = 'u8[4096]{0}', space=vmem, size = 0x1000, scoped, tag = 'input window, operand 0, single buffered']
    #allocation3 [shape = 's32[1]{0}', space=sflag, size = 0x4, scoped, tag = 'scoped memory for tpu_custom_call.1']
    #allocation4 [shape = 's32[1]{0}', space=sflag, size = 0x4, scoped, tag = 'scoped memory for tpu_custom_call.1']
    #allocation5 [shape = 'u8[65536]{0}', space=vmem, size = 0x10000, scoped, tag = 'input window, operand 1, single buffered']
    #allocation6 [shape = 's32[1]{0}', space=sflag, size = 0x4, scoped, tag = 'scoped memory for tpu_custom_call.1']
    #allocation7 [shape = 'u8[65536]{0}', space=vmem, size = 0x10000, scoped, tag = 'input window, operand 3, single buffered']
    #allocation8 [shape = 'u8[4096]{0}', space=vmem, size = 0x1000, scoped, tag = 'output window, operand 0, single buffered']
    %10 = vsyncpa [#allocation3], 0
    %11 = vsyncpa [#allocation6], 0
    %12 = vsyncpa [#allocation4], 0
    // Predicated region
    $region2: #{tpu_custom_call.1} parent=1 // pred_check
      _
    $region3: #{tpu_custom_call.1} parent=1 // pred_check_branch
      %14 = sbr.rel (0) target = $region5
    $region4: #{tpu_custom_call.1} parent=1 // pred_region
      %16 = vsyncadd [#allocation3], 0
      %s18 = sshll.u32 %s0, 4
      %s19 = int_to_ptr.hbm [resolvable:$true] %s18
      %s20 = sshll.u32 [#allocation2], 4
      %s21 = int_to_ptr.vmem [resolvable:$true] %s20
      %23 = dma.hbm_to_vmem [thread:$0]  %s19, 128, %s21, [#allocation3]
    $region5: #{tpu_custom_call.1} parent=1 // pred_fallthru
      _
    // Predicated region
    $region6: #{tpu_custom_call.1} parent=1 // pred_check
      _
    $region7: #{tpu_custom_call.1} parent=1 // pred_check_branch
      %25 = sbr.rel (0) target = $region9
    $region8: #{tpu_custom_call.1} parent=1 // pred_region
      %27 = vsyncadd [#allocation6], 0
      %s28 = sshll.u32 %s1, 4
      %s29 = int_to_ptr.hbm [resolvable:$true] %s28
      %s30 = sshll.u32 [#allocation5], 4
      %s31 = int_to_ptr.vmem [resolvable:$true] %s30
      %36 = dma.hbm_to_vmem [thread:$0]  %s29, 2048, %s31, [#allocation6], 128, 128, 8
    $region9: #{tpu_custom_call.1} parent=1 // pred_fallthru
      _
    // Predicated region
    $region10: #{tpu_custom_call.1} parent=1 // pred_check
      _
    $region11: #{tpu_custom_call.1} parent=1 // pred_check_branch
      %38 = sbr.rel (0) target = $region13
    $region12: #{tpu_custom_call.1} parent=1 // pred_region
      _
    $region13: #{tpu_custom_call.1} parent=1 // pred_fallthru
      _
    // Predicated region
    $region14: #{tpu_custom_call.1} parent=1 // pred_check
      _
    $region15: #{tpu_custom_call.1} parent=1 // pred_check_branch
      %40 = sbr.rel (0) target = $region17
    $region16: #{tpu_custom_call.1} parent=1 // pred_region
      %42 = vsyncadd [#allocation6], 0
      %s43 = sshll.u32 %s3, 4
      %s44 = int_to_ptr.hbm [resolvable:$true] %s43
      %s45 = sshll.u32 [#allocation7], 4
      %s46 = int_to_ptr.vmem [resolvable:$true] %s45
      %51 = dma.hbm_to_vmem [thread:$0]  %s44, 2048, %s46, [#allocation6], 128, 128, 8
    $region17: #{tpu_custom_call.1} parent=1 // pred_fallthru
      _
    // Predicated region
    $region18: #{tpu_custom_call.1} parent=1 // pred_check
      _
    $region19: #{tpu_custom_call.1} parent=1 // pred_check_branch
      %53 = sbr.rel (0) target = $region21
    $region20: #{tpu_custom_call.1} parent=1 // pred_region
      _
    $region21: #{tpu_custom_call.1} parent=1 // pred_fallthru
      _
    // Predicated region
    $region22: #{tpu_custom_call.1} parent=1 // pred_check
      _
    $region23: #{tpu_custom_call.1} parent=1 // pred_check_branch
      %55 = sbr.rel (0) target = $region25
    $region24: #{tpu_custom_call.1} parent=1 // pred_region
      %57 = dma.done [#allocation3], 128
    $region25: #{tpu_custom_call.1} parent=1 // pred_fallthru
      _
    // Predicated region
    $region26: #{tpu_custom_call.1} parent=1 // pred_check
      _
    $region27: #{tpu_custom_call.1} parent=1 // pred_check_branch
      %59 = sbr.rel (0) target = $region29
    $region28: #{tpu_custom_call.1} parent=1 // pred_region
      %61 = dma.done [#allocation6], 2048
    $region29: #{tpu_custom_call.1} parent=1 // pred_fallthru
      _
    // Predicated region
    $region30: #{tpu_custom_call.1} parent=1 // pred_check
      _
    $region31: #{tpu_custom_call.1} parent=1 // pred_check_branch
      %63 = sbr.rel (0) target = $region33
    $region32: #{tpu_custom_call.1} parent=1 // pred_region
      %65 = dma.done [#allocation6], 2048
    $region33: #{tpu_custom_call.1} parent=1 // pred_fallthru
      _
    %v66 = vld [vmem:[#allocation2] sm:$0xff]
    %v67 = vld [vmem:[#allocation5] sm:$0xff]
    %v68 = vld [vmem:[#allocation5 + $0x8] sm:$0xff]
    %v69 = vld [vmem:[#allocation5 + $0x10] sm:$0xff]
    %v70 = vld [vmem:[#allocation5 + $0x18] sm:$0xff]
    %v71 = vld [vmem:[#allocation5 + $0x20] sm:$0xff]
    %v72 = vld [vmem:[#allocation5 + $0x28] sm:$0xff]
    %v73 = vld [vmem:[#allocation5 + $0x30] sm:$0xff]
    %v74 = vld [vmem:[#allocation5 + $0x38] sm:$0xff]
    %v75 = vld [vmem:[#allocation5 + $0x40] sm:$0xff]
    %v76 = vld [vmem:[#allocation5 + $0x48] sm:$0xff]
    %v77 = vld [vmem:[#allocation5 + $0x50] sm:$0xff]
    %v78 = vld [vmem:[#allocation5 + $0x58] sm:$0xff]
    %v79 = vld [vmem:[#allocation5 + $0x60] sm:$0xff]
    %v80 = vld [vmem:[#allocation5 + $0x68] sm:$0xff]
    %v81 = vld [vmem:[#allocation5 + $0x70] sm:$0xff]
    %v82 = vld [vmem:[#allocation5 + $0x78] sm:$0xff]
    %v83 = vld [vmem:[%s2] sm:$0x1]
    %v85 = vperm.slane %v83, 0
    %87 = vmatpush.msra.mxu0 %v82
    %88 = vmatpush.msra.mxu0 %v81
    %89 = vmatpush.msra.mxu0 %v80
    %90 = vmatpush.msra.mxu0 %v79
    %91 = vmatpush.msra.mxu0 %v78
    %92 = vmatpush.msra.mxu0 %v77
    %93 = vmatpush.msra.mxu0 %v76
    %94 = vmatpush.msra.mxu0 %v75
    %95 = vmatpush.msra.mxu0 %v74
    %96 = vmatpush.msra.mxu0 %v73
    %97 = vmatpush.msra.mxu0 %v72
    %98 = vmatpush.msra.mxu0 %v71
    %99 = vmatpush.msra.mxu0 %v70
    %100 = vmatpush.msra.mxu0 %v69
    %101 = vmatpush.msra.mxu0 %v68
    %102 = vmatpush.msra.mxu0 %v67
    %103 = vmatmul.f32.gmra.mxu0 %v66
    %v104 = vpop.f32.mrf.mxu0
    %v105 = vadd.f32 %v85, %v104
    %106 = vdwg.mxu0
    %v107 = vmax.f32 %v105, 0.0
    %v108 = vld [vmem:[#allocation7] sm:$0xff]
    %v109 = vld [vmem:[#allocation7 + $0x8] sm:$0xff]
    %v110 = vld [vmem:[#allocation7 + $0x10] sm:$0xff]
    %v111 = vld [vmem:[#allocation7 + $0x18] sm:$0xff]
    %v112 = vld [vmem:[#allocation7 + $0x20] sm:$0xff]
    %v113 = vld [vmem:[#allocation7 + $0x28] sm:$0xff]
    %v114 = vld [vmem:[#allocation7 + $0x30] sm:$0xff]
    %v115 = vld [vmem:[#allocation7 + $0x38] sm:$0xff]
    %v116 = vld [vmem:[#allocation7 + $0x40] sm:$0xff]
    %v117 = vld [vmem:[#allocation7 + $0x48] sm:$0xff]
    %v118 = vld [vmem:[#allocation7 + $0x50] sm:$0xff]
    %v119 = vld [vmem:[#allocation7 + $0x58] sm:$0xff]
    %v120 = vld [vmem:[#allocation7 + $0x60] sm:$0xff]
    %v121 = vld [vmem:[#allocation7 + $0x68] sm:$0xff]
    %v122 = vld [vmem:[#allocation7 + $0x70] sm:$0xff]
    %v123 = vld [vmem:[#allocation7 + $0x78] sm:$0xff]
    %v124 = vld [vmem:[%s4] sm:$0x1]
    %v126 = vperm.slane %v124, 0
    %128 = vmatpush.msra.mxu0 %v123
    %129 = vmatpush.msra.mxu0 %v122
    %130 = vmatpush.msra.mxu0 %v121
    %131 = vmatpush.msra.mxu0 %v120
    %132 = vmatpush.msra.mxu0 %v119
    %133 = vmatpush.msra.mxu0 %v118
    %134 = vmatpush.msra.mxu0 %v117
    %135 = vmatpush.msra.mxu0 %v116
    %136 = vmatpush.msra.mxu0 %v115
    %137 = vmatpush.msra.mxu0 %v114
    %138 = vmatpush.msra.mxu0 %v113
    %139 = vmatpush.msra.mxu0 %v112
    %140 = vmatpush.msra.mxu0 %v111
    %141 = vmatpush.msra.mxu0 %v110
    %142 = vmatpush.msra.mxu0 %v109
    %143 = vmatpush.msra.mxu0 %v108
    %144 = vmatmul.f32.gmra.mxu0 %v107
    %v145 = vpop.f32.mrf.mxu0
    %v146 = vadd.f32 %v126, %v145
    %147 = vdwg.mxu0
    %148 = vst [vmem:[#allocation8] sm:$0xff] %v146
    // Predicated region
    $region34: #{tpu_custom_call.1} parent=1 // pred_check
      _
    $region35: #{tpu_custom_call.1} parent=1 // pred_check_branch
      %150 = sbr.rel (0) target = $region37
    $region36: #{tpu_custom_call.1} parent=1 // pred_region
      %152 = vsyncadd [#allocation4], 0
      %s154 = sshll.u32 [#allocation8], 4
      %s155 = int_to_ptr.vmem [resolvable:$true] %s154
      %s156 = sshll.u32 %s5, 4
      %s157 = int_to_ptr.hbm [resolvable:$true] %s156
      %159 = dma.vmem_to_hbm [thread:$0]  %s155, 128, %s157, [#allocation4]
    $region37: #{tpu_custom_call.1} parent=1 // pred_fallthru
      _
    // Predicated region
    $region38: #{tpu_custom_call.1} parent=1 // pred_check
      _
    $region39: #{tpu_custom_call.1} parent=1 // pred_check_branch
      %161 = sbr.rel (0) target = $region41
    $region40: #{tpu_custom_call.1} parent=1 // pred_region
      %163 = dma.done [#allocation4], 128
    $region41: #{tpu_custom_call.1} parent=1 // pred_fallthru
      _
    %164 = vsyncpa [#allocation3], 1
    %165 = vsyncpa [#allocation6], 1
    %166 = vsyncpa [#allocation4], 1

// kernel: tpu_custom_call.1
$region0: #{tpu_custom_call.1}
  #allocation0 [shape = 'u32[]', space=smem, size = 0x4, offset = 0x4, fixed_abs, tag = 'smem constant byte address 0x4 - core index']
  #allocation1 [shape = 'u32[72,128]{1,0:T(1,128)}', space=vmem, size = 0x9000, scoped, tag = 'internal scratch']
  %s0 = inlined_call_operand.hbm [shape: f32[8,128], index: 0, kind: input, shape index: {}]
  %s1 = inlined_call_operand.hbm [shape: f32[128,128], index: 1, kind: input, shape index: {}]
  %s2 = inlined_call_operand.vmem [shape: f32[1,128], index: 2, kind: input, shape index: {}]
  %s3 = inlined_call_operand.hbm [shape: f32[128,128], index: 3, kind: input, shape index: {}]
  %s4 = inlined_call_operand.vmem [shape: f32[1,128], index: 4, kind: input, shape index: {}]
  %s5 = inlined_call_operand.hbm [shape: f32[8,128], index: 5, kind: output, shape index: {}]
  %s6 = sld [smem:[#allocation0]]
  $region42: #{tpu_custom_call.1} parent=0
    _
  %s8 = ssub.s32 1, %s6
  %s9 = scalar_select 0, %s8, %s6
  $region1: #{tpu_custom_call.1} parent=0
    #allocation2 [shape = 'u8[4096]{0}', space=vmem, size = 0x1000, scoped, tag = 'input window, operand 0, single buffered']
    #allocation3 [shape = 's32[1]{0}', space=sflag, size = 0x4, scoped, tag = 'scoped memory for tpu_custom_call.1']
    #allocation4 [shape = 's32[1]{0}', space=sflag, size = 0x4, scoped, tag = 'scoped memory for tpu_custom_call.1']
    #allocation5 [shape = 'u8[65536]{0}', space=vmem, size = 0x10000, scoped, tag = 'input window, operand 1, single buffered']
    #allocation6 [shape = 's32[1]{0}', space=sflag, size = 0x4, scoped, tag = 'scoped memory for tpu_custom_call.1']
    #allocation7 [shape = 'u8[65536]{0}', space=vmem, size = 0x10000, scoped, tag = 'input window, operand 3, single buffered']
    #allocation8 [shape = 'u8[4096]{0}', space=vmem, size = 0x1000, scoped, tag = 'output window, operand 0, single buffered']
    %10 = vsyncpa [#allocation3], 0
    %11 = vsyncpa [#allocation6], 0
    %12 = vsyncpa [#allocation4], 0
    // Predicated region
    $region2: #{tpu_custom_call.1} parent=1 // pred_check
      _
    $region3: #{tpu_custom_call.1} parent=1 // pred_check_branch
      %14 = sbr.rel (0) target = $region5
    $region4: #{tpu_custom_call.1} parent=1 // pred_region
      %16 = vsyncadd [#allocation3], 0
      %s18 = sshll.u32 %s0, 4
      %s19 = int_to_ptr.hbm [resolvable:$true] %s18
      %s20 = sshll.u32 [#allocation2], 4
      %s21 = int_to_ptr.vmem [resolvable:$true] %s20
      %23 = dma.hbm_to_vmem [thread:$0]  %s19, 128, %s21, [#allocation3]
    $region5: #{tpu_custom_call.1} parent=1 // pred_fallthru
      _
    // Predicated region
    $region6: #{tpu_custom_call.1} parent=1 // pred_check
      _
    $region7: #{tpu_custom_call.1} parent=1 // pred_check_branch
      %25 = sbr.rel (0) target = $region9
    $region8: #{tpu_custom_call.1} parent=1 // pred_region
      %27 = vsyncadd [#allocation6], 0
      %s28 = sshll.u32 %s1, 4
      %s29 = int_to_ptr.hbm [resolvable:$true] %s28
      %s30 = sshll.u32 [#allocation5], 4
      %s31 = int_to_ptr.vmem [resolvable:$true] %s30
      %36 = dma.hbm_to_vmem [thread:$0]  %s29, 2048, %s31, [#allocation6], 128, 128, 8
    $region9: #{tpu_custom_call.1} parent=1 // pred_fallthru
      _
    // Predicated region
    $region10: #{tpu_custom_call.1} parent=1 // pred_check
      _
    $region11: #{tpu_custom_call.1} parent=1 // pred_check_branch
      %38 = sbr.rel (0) target = $region13
    $region12: #{tpu_custom_call.1} parent=1 // pred_region
      _
    $region13: #{tpu_custom_call.1} parent=1 // pred_fallthru
      _
    // Predicated region
    $region14: #{tpu_custom_call.1} parent=1 // pred_check
      _
    $region15: #{tpu_custom_call.1} parent=1 // pred_check_branch
      %40 = sbr.rel (0) target = $region17
    $region16: #{tpu_custom_call.1} parent=1 // pred_region
      %42 = vsyncadd [#allocation6], 0
      %s43 = sshll.u32 %s3, 4
      %s44 = int_to_ptr.hbm [resolvable:$true] %s43
      %s45 = sshll.u32 [#allocation7], 4
      %s46 = int_to_ptr.vmem [resolvable:$true] %s45
      %51 = dma.hbm_to_vmem [thread:$0]  %s44, 2048, %s46, [#allocation6], 128, 128, 8
    $region17: #{tpu_custom_call.1} parent=1 // pred_fallthru
      _
    // Predicated region
    $region18: #{tpu_custom_call.1} parent=1 // pred_check
      _
    $region19: #{tpu_custom_call.1} parent=1 // pred_check_branch
      %53 = sbr.rel (0) target = $region21
    $region20: #{tpu_custom_call.1} parent=1 // pred_region
      _
    $region21: #{tpu_custom_call.1} parent=1 // pred_fallthru
      _
    // Predicated region
    $region22: #{tpu_custom_call.1} parent=1 // pred_check
      _
    $region23: #{tpu_custom_call.1} parent=1 // pred_check_branch
      %55 = sbr.rel (0) target = $region25
    $region24: #{tpu_custom_call.1} parent=1 // pred_region
      %57 = dma.done [#allocation3], 128
    $region25: #{tpu_custom_call.1} parent=1 // pred_fallthru
      _
    // Predicated region
    $region26: #{tpu_custom_call.1} parent=1 // pred_check
      _
    $region27: #{tpu_custom_call.1} parent=1 // pred_check_branch
      %59 = sbr.rel (0) target = $region29
    $region28: #{tpu_custom_call.1} parent=1 // pred_region
      %61 = dma.done [#allocation6], 2048
    $region29: #{tpu_custom_call.1} parent=1 // pred_fallthru
      _
    // Predicated region
    $region30: #{tpu_custom_call.1} parent=1 // pred_check
      _
    $region31: #{tpu_custom_call.1} parent=1 // pred_check_branch
      %63 = sbr.rel (0) target = $region33
    $region32: #{tpu_custom_call.1} parent=1 // pred_region
      %65 = dma.done [#allocation6], 2048
    $region33: #{tpu_custom_call.1} parent=1 // pred_fallthru
      _
    %v66 = vld [vmem:[#allocation2] sm:$0xff]
    %v67 = vld [vmem:[#allocation5] sm:$0xff]
    %v68 = vld [vmem:[#allocation5 + $0x8] sm:$0xff]
    %v69 = vld [vmem:[#allocation5 + $0x10] sm:$0xff]
    %v70 = vld [vmem:[#allocation5 + $0x18] sm:$0xff]
    %v71 = vld [vmem:[#allocation5 + $0x20] sm:$0xff]
    %v72 = vld [vmem:[#allocation5 + $0x28] sm:$0xff]
    %v73 = vld [vmem:[#allocation5 + $0x30] sm:$0xff]
    %v74 = vld [vmem:[#allocation5 + $0x38] sm:$0xff]
    %v75 = vld [vmem:[#allocation5 + $0x40] sm:$0xff]
    %v76 = vld [vmem:[#allocation5 + $0x48] sm:$0xff]
    %v77 = vld [vmem:[#allocation5 + $0x50] sm:$0xff]
    %v78 = vld [vmem:[#allocation5 + $0x58] sm:$0xff]
    %v79 = vld [vmem:[#allocation5 + $0x60] sm:$0xff]
    %v80 = vld [vmem:[#allocation5 + $0x68] sm:$0xff]
    %v81 = vld [vmem:[#allocation5 + $0x70] sm:$0xff]
    %v82 = vld [vmem:[#allocation5 + $0x78] sm:$0xff]
    %v83 = vld [vmem:[%s2] sm:$0x1]
    %v85 = vperm.slane %v83, 0
    %87 = vmatpush.msra.mxu0 %v82
    %88 = vmatpush.msra.mxu0 %v81
    %89 = vmatpush.msra.mxu0 %v80
    %90 = vmatpush.msra.mxu0 %v79
    %91 = vmatpush.msra.mxu0 %v78
    %92 = vmatpush.msra.mxu0 %v77
    %93 = vmatpush.msra.mxu0 %v76
    %94 = vmatpush.msra.mxu0 %v75
    %95 = vmatpush.msra.mxu0 %v74
    %96 = vmatpush.msra.mxu0 %v73
    %97 = vmatpush.msra.mxu0 %v72
    %98 = vmatpush.msra.mxu0 %v71
    %99 = vmatpush.msra.mxu0 %v70
    %100 = vmatpush.msra.mxu0 %v69
    %101 = vmatpush.msra.mxu0 %v68
    %102 = vmatpush.msra.mxu0 %v67
    %103 = vmatmul.f32.gmra.mxu0 %v66
    %v104 = vpop.f32.mrf.mxu0
    %v105 = vadd.f32 %v85, %v104
    %106 = vdwg.mxu0
    %v107 = vmax.f32 %v105, 0.0
    %v108 = vld [vmem:[#allocation7] sm:$0xff]
    %v109 = vld [vmem:[#allocation7 + $0x8] sm:$0xff]
    %v110 = vld [vmem:[#allocation7 + $0x10] sm:$0xff]
    %v111 = vld [vmem:[#allocation7 + $0x18] sm:$0xff]
    %v112 = vld [vmem:[#allocation7 + $0x20] sm:$0xff]
    %v113 = vld [vmem:[#allocation7 + $0x28] sm:$0xff]
    %v114 = vld [vmem:[#allocation7 + $0x30] sm:$0xff]
    %v115 = vld [vmem:[#allocation7 + $0x38] sm:$0xff]
    %v116 = vld [vmem:[#allocation7 + $0x40] sm:$0xff]
    %v117 = vld [vmem:[#allocation7 + $0x48] sm:$0xff]
    %v118 = vld [vmem:[#allocation7 + $0x50] sm:$0xff]
    %v119 = vld [vmem:[#allocation7 + $0x58] sm:$0xff]
    %v120 = vld [vmem:[#allocation7 + $0x60] sm:$0xff]
    %v121 = vld [vmem:[#allocation7 + $0x68] sm:$0xff]
    %v122 = vld [vmem:[#allocation7 + $0x70] sm:$0xff]
    %v123 = vld [vmem:[#allocation7 + $0x78] sm:$0xff]
    %v124 = vld [vmem:[%s4] sm:$0x1]
    %v126 = vperm.slane %v124, 0
    %128 = vmatpush.msra.mxu0 %v123
    %129 = vmatpush.msra.mxu0 %v122
    %130 = vmatpush.msra.mxu0 %v121
    %131 = vmatpush.msra.mxu0 %v120
    %132 = vmatpush.msra.mxu0 %v119
    %133 = vmatpush.msra.mxu0 %v118
    %134 = vmatpush.msra.mxu0 %v117
    %135 = vmatpush.msra.mxu0 %v116
    %136 = vmatpush.msra.mxu0 %v115
    %137 = vmatpush.msra.mxu0 %v114
    %138 = vmatpush.msra.mxu0 %v113
    %139 = vmatpush.msra.mxu0 %v112
    %140 = vmatpush.msra.mxu0 %v111
    %141 = vmatpush.msra.mxu0 %v110
    %142 = vmatpush.msra.mxu0 %v109
    %143 = vmatpush.msra.mxu0 %v108
    %144 = vmatmul.f32.gmra.mxu0 %v107
    %v145 = vpop.f32.mrf.mxu0
    %v146 = vadd.f32 %v126, %v145
    %147 = vdwg.mxu0
    %148 = vst [vmem:[#allocation8] sm:$0xff] %v146
    // Predicated region
    $region34: #{tpu_custom_call.1} parent=1 // pred_check
      _
    $region35: #{tpu_custom_call.1} parent=1 // pred_check_branch
      %150 = sbr.rel (0) target = $region37
    $region36: #{tpu_custom_call.1} parent=1 // pred_region
      %152 = vsyncadd [#allocation4], 0
      %s154 = sshll.u32 [#allocation8], 4
      %s155 = int_to_ptr.vmem [resolvable:$true] %s154
      %s156 = sshll.u32 %s5, 4
      %s157 = int_to_ptr.hbm [resolvable:$true] %s156
      %159 = dma.vmem_to_hbm [thread:$0]  %s155, 128, %s157, [#allocation4]
    $region37: #{tpu_custom_call.1} parent=1 // pred_fallthru
      _
    // Predicated region
    $region38: #{tpu_custom_call.1} parent=1 // pred_check
      _
    $region39: #{tpu_custom_call.1} parent=1 // pred_check_branch
      %161 = sbr.rel (0) target = $region41
    $region40: #{tpu_custom_call.1} parent=1 // pred_region
      %163 = dma.done [#allocation4], 128
    $region41: #{tpu_custom_call.1} parent=1 // pred_fallthru
      _
    %164 = vsyncpa [#allocation3], 1
    %165 = vsyncpa [#allocation6], 1
    %166 = vsyncpa [#allocation4], 1

</llo_original>
